<compile_context>
chip_gen: v6e
topology: v6e:2x2x1
jax: 0.10.0
libtpu: 0.0.40
codegen_flags: <defaults>
</compile_context>

<pallas_src>
import functools
import math

import jax
import jax.numpy as jnp
from jax.experimental import pallas as pl
from jax.experimental.pallas import tpu as pltpu


# ------------------------- Pre-projection kernel --------------------------- #

def _preproject_kernel(h_ref, ws_ref, wn_ref, b_ref, s_ref, xw_ref):
    """Per node tile:  S = h @ W_self + b  (f32),  XW = h @ W_neigh (bf16)."""
    h = h_ref[0]
    s_ref[0] = (jnp.dot(h, ws_ref[...], preferred_element_type=jnp.float32)
                + b_ref[...])
    xw_ref[0] = jnp.dot(h, wn_ref[...],
                        preferred_element_type=jnp.float32).astype(jnp.bfloat16)


def sage_preproject(h_stack, w_self, w_neigh, bias, *, tm):
    """h_stack: (2, N, F_in) bf16 -> (S f32, XW bf16), each (2, N, F_out)."""
    _, n, f_in = h_stack.shape
    f_out = w_self.shape[-1]
    assert n % tm == 0 and f_in % 128 == 0 and f_out % 128 == 0
    # F_in is small for this model (<=128 padded): single-shot contraction.

    flops = 2 * 2 * 2 * n * f_in * f_out
    bytes_accessed = (2 * n * f_in * 2 + 2 * 2 * f_in * f_out
                      + 2 * n * f_out * (4 + 2))
    return pl.pallas_call(
        _preproject_kernel,
        out_shape=(jax.ShapeDtypeStruct((2, n, f_out), jnp.float32),
                   jax.ShapeDtypeStruct((2, n, f_out), jnp.bfloat16)),
        grid=(2, n // tm),
        in_specs=[
            pl.BlockSpec((1, tm, f_in), lambda d, i: (d, i, 0)),   # h
            pl.BlockSpec((f_in, f_out), lambda d, i: (0, 0)),      # W_self
            pl.BlockSpec((f_in, f_out), lambda d, i: (0, 0)),      # W_neigh
            pl.BlockSpec((1, f_out), lambda d, i: (0, 0)),         # bias
        ],
        out_specs=(pl.BlockSpec((1, tm, f_out), lambda d, i: (d, i, 0)),
                   pl.BlockSpec((1, tm, f_out), lambda d, i: (d, i, 0))),
        compiler_params=pltpu.CompilerParams(
            dimension_semantics=("parallel", "parallel")),
        cost_estimate=pl.CostEstimate(flops=flops, transcendentals=0,
                                      bytes_accessed=bytes_accessed),
    )(h_stack, w_self, w_neigh, bias)


# --------------------------- Aggregation kernel ----------------------------- #

def _aggregate_kernel(a_ref, xw_ref, s_ref, o_ref, acc_ref, *,
                      act_on_output: bool, xw_resident: bool, tk: int):
    """acc(tm, F_out) = S_tile + sum_k A[:, k-tile] @ XW[k-tile]."""
    k = pl.program_id(2)

    @pl.when(k == 0)
    def _init():
        acc_ref[...] = s_ref[0]                 # self term + bias, precomputed

    if xw_resident:
        off = pl.multiple_of(k * tk, tk)
        xw = xw_ref[0, pl.ds(off, tk), :]       # VMEM-resident XW, slice per k
    else:
        xw = xw_ref[0]
    acc_ref[...] += jnp.dot(a_ref[0], xw, preferred_element_type=jnp.float32)

    @pl.when(k == pl.num_programs(2) - 1)
    def _finalize():
        out = acc_ref[...]
        if act_on_output:                       # ReLU fused into producer layer
            out = jnp.maximum(out, 0.0)
        o_ref[0] = out.astype(o_ref.dtype)


def sage_aggregate(a_stack, xw_stack, s_stack, *, act_on_output: bool,
                   tm: int, tk: int, xw_resident_budget: int = 8 << 20):
    """Both graph directions of one SAGEConv layer in a single pallas_call.

    a_stack : (2, N, N)      bf16  row-normalized adjacencies [reverse(g), g]
    xw_stack: (2, N, F_out)  bf16  XW[d] = h[d] @ W_neigh (swap via index_map)
    s_stack : (2, N, F_out)  f32   S[d]  = h[d] @ W_self + b
    returns : (2, N, F_out)  bf16
    """
    _, n_dst, n_src = a_stack.shape
    f_out = xw_stack.shape[-1]
    assert n_dst % tm == 0 and n_src % tk == 0 and f_out % 128 == 0

    # Keep XW VMEM-resident across dst tiles when it is small enough, so A is
    # the only HBM-streamed operand of the O(N^2) loop.
    xw_resident = (n_src * f_out * 2) <= xw_resident_budget
    if xw_resident:
        xw_spec = pl.BlockSpec((1, n_src, f_out), lambda d, i, k: (1 - d, 0, 0))
        xw_rows = n_src
        xw_reads = 2 * n_src * f_out * 2
    else:
        xw_spec = pl.BlockSpec((1, tk, f_out), lambda d, i, k: (1 - d, k, 0))
        xw_rows = tk
        xw_reads = 2 * (n_dst // tm) * n_src * f_out * 2

    grid = (2, n_dst // tm, n_src // tk)
    flops = 2 * 2 * n_dst * n_src * f_out
    bytes_accessed = (2 * n_dst * n_src * 2 + xw_reads
                      + 2 * n_dst * f_out * 4 + 2 * n_dst * f_out * 2)

    # VMEM budget: double-buffered A, XW, S, out + f32 accumulator (+ margin).
    vmem_need = (2 * tm * tk * 2 + 2 * xw_rows * f_out * 2
                 + 2 * tm * f_out * 4 + 2 * tm * f_out * 2 + tm * f_out * 4)
    vmem_limit = min(max(2 * vmem_need + (4 << 20), 32 << 20), 64 << 20)

    kernel = functools.partial(_aggregate_kernel, act_on_output=act_on_output,
                               xw_resident=xw_resident, tk=tk)
    return pl.pallas_call(
        kernel,
        out_shape=jax.ShapeDtypeStruct((2, n_dst, f_out), jnp.bfloat16),
        grid=grid,
        in_specs=[
            pl.BlockSpec((1, tm, tk), lambda d, i, k: (d, i, k)),      # A
            xw_spec,                                                   # XW
            pl.BlockSpec((1, tm, f_out), lambda d, i, k: (d, i, 0)),   # S
        ],
        out_specs=pl.BlockSpec((1, tm, f_out), lambda d, i, k: (d, i, 0)),
        scratch_shapes=[pltpu.VMEM((tm, f_out), jnp.float32)],
        compiler_params=pltpu.CompilerParams(
            dimension_semantics=("parallel", "parallel", "arbitrary"),
            vmem_limit_bytes=int(vmem_limit)),
        cost_estimate=pl.CostEstimate(flops=flops, transcendentals=0,
                                      bytes_accessed=bytes_accessed),
    )(a_stack, xw_stack, s_stack)


# ------------------------------ Model wrapper ------------------------------ #

def _round_up(x, m):
    return ((x + m - 1) // m) * m


def _pad_to(x, shape):
    return jnp.pad(x, [(0, s - d) for d, s in zip(x.shape, shape)])


def _pick_tile(n_pad, max_tile=512):
    """Largest tile (multiple of 128, <= max_tile) that divides n_pad."""
    for t in (512, 384, 256, 128):
        if t <= max_tile and n_pad % t == 0:
            return t
    return 128


def init_graphsage_params(key, in_feats, n_hidden, n_classes, n_layers,
                          lane=128):
    """(n_layers + 1) SAGEConv layers; weights zero-padded to lane multiples."""
    dims = [(in_feats, n_hidden)]
    dims += [(n_hidden, n_hidden)] * (n_layers - 1)
    dims += [(n_hidden, n_classes)]
    params = []
    for fi, fo in dims:
        key, k1, k2 = jax.random.split(key, 3)
        scale = 1.0 / jnp.sqrt(jnp.float32(fi))
        fi_p, fo_p = _round_up(fi, lane), _round_up(fo, lane)
        w_self = jnp.zeros((fi_p, fo_p), jnp.float32)
        w_self = w_self.at[:fi, :fo].set(
            jax.random.normal(k1, (fi, fo), jnp.float32) * scale)
        w_neigh = jnp.zeros((fi_p, fo_p), jnp.float32)
        w_neigh = w_neigh.at[:fi, :fo].set(
            jax.random.normal(k2, (fi, fo), jnp.float32) * scale)
        bias = jnp.zeros((1, fo_p), jnp.float32)
        params.append((w_self.astype(jnp.bfloat16),
                       w_neigh.astype(jnp.bfloat16),
                       bias))
    return params


def graphsage_forward(a_norm, a_rev_norm, features, params, n_classes,
                      *, max_tile=512):
    """Reproduces GraphSage.forward(g, features) with features = (x0, x1)."""
    n = a_norm.shape[0]
    n_pad = _round_up(n, 128)
    tile = _pick_tile(n_pad, max_tile)
    f_in_pad = params[0][0].shape[0]

    # Stacked directions: index 0 = reverse(g), index 1 = g.
    # (Degree normalization was computed BEFORE padding; padded rows/cols are
    #  zero and sliced off at the end, so the mean aggregation is unaffected.)
    a_stack = jnp.stack([
        _pad_to(a_rev_norm, (n_pad, n_pad)),
        _pad_to(a_norm, (n_pad, n_pad)),
    ]).astype(jnp.bfloat16)

    # h[0] = h0, h[1] = h1 (row/feature padded, bf16).
    h = jnp.stack([
        _pad_to(features[0], (n_pad, f_in_pad)),
        _pad_to(features[1], (n_pad, f_in_pad)),
    ]).astype(jnp.bfloat16)

    n_total = len(params)
    for i, (w_self, w_neigh, bias) in enumerate(params):
        # Hoisted pre-projection: S[d] = h[d]@W_self + b, XW[d] = h[d]@W_neigh.
        s_stack, xw_stack = sage_preproject(h, w_self, w_neigh, bias, tm=tile)
        # Direction d aggregates A[d] @ XW[1-d] (src features are the swapped
        # pair); the swap lives in the XW index_map -> no h[::-1] copy.
        h = sage_aggregate(a_stack, xw_stack, s_stack,
                           act_on_output=(i < n_total - 1), tm=tile, tk=tile)
    return h[1, :n, :n_classes].astype(jnp.float32)


# --------------------------- Pure-JAX reference ----------------------------- #

def _reference_forward(a_stack, h_stack, params, n_layers_total):
    """f32 reference on the same (padded, bf16-rounded) inputs."""
    a_rev = a_stack[0].astype(jnp.float32)
    a_fwd = a_stack[1].astype(jnp.float32)
    h0 = h_stack[0].astype(jnp.float32)
    h1 = h_stack[1].astype(jnp.float32)
    for i, (ws, wn, b) in enumerate(params):
        ws = ws.astype(jnp.float32)
        wn = wn.astype(jnp.float32)
        new0 = h0 @ ws + (a_rev @ h1) @ wn + b
        new1 = h1 @ ws + (a_fwd @ h0) @ wn + b
        if i < n_layers_total - 1:
            new0 = jnp.maximum(new0, 0.0)
            new1 = jnp.maximum(new1, 0.0)
        h0, h1 = new0, new1
    return h1


# --------------------------------- Main ------------------------------------ #

if __name__ == "__main__":
    # Small deterministic problem (multiple of 128 so no row padding needed).
    N = 256
    IN_FEATS = 8
    N_HIDDEN = 32
    N_CLASSES = 8
    N_LAYERS = 2          # => 3 SAGEConv layers total

    key = jax.random.PRNGKey(0)
    key, ka, kx0, kx1, kp = jax.random.split(key, 5)

    # Random graph -> dense adjacency, A[v, u] = 1 iff edge u -> v, no self loops.
    adj = (jax.random.uniform(ka, (N, N)) < 0.05).astype(jnp.float32)
    adj = adj * (1.0 - jnp.eye(N, dtype=jnp.float32))

    # Row-normalized (mean) adjacencies for g and dgl.reverse(g).
    deg = jnp.maximum(adj.sum(axis=1, keepdims=True), 1.0)
    a_norm = adj / deg
    adj_rev = adj.T
    deg_rev = jnp.maximum(adj_rev.sum(axis=1, keepdims=True), 1.0)
    a_rev_norm = adj_rev / deg_rev

    # features is a pair of node-feature tensors (forward asserts len == 2).
    x0 = jax.random.normal(kx0, (N, IN_FEATS), jnp.float32)
    x1 = jax.random.normal(kx1, (N, IN_FEATS), jnp.float32)

    params = init_graphsage_params(kp, IN_FEATS, N_HIDDEN, N_CLASSES, N_LAYERS)

    out = graphsage_forward(a_norm, a_rev_norm, (x0, x1), params, N_CLASSES)
    out = jax.block_until_ready(out)
    assert out.shape == (N, N_CLASSES), out.shape

    # Sanity check against an f32 reference on the same bf16-rounded inputs.
    f_in_pad = params[0][0].shape[0]
    a_stack = jnp.stack([a_rev_norm, a_norm]).astype(jnp.bfloat16)
    h_stack = jnp.stack([
        _pad_to(x0, (N, f_in_pad)), _pad_to(x1, (N, f_in_pad))
    ]).astype(jnp.bfloat16)
    ref = _reference_forward(a_stack, h_stack, params, len(params))
    ref = ref[:N, :N_CLASSES]
    rel_err = jnp.max(jnp.abs(out - ref)) / (jnp.max(jnp.abs(ref)) + 1e-6)
    assert float(rel_err) < 0.08, float(rel_err)

    print("KERNEL_OK")
</pallas_src>

<mosaic_0001>
module attributes {stable_mosaic.version = 11 : i64} {
  func.func @_preproject_kernel(%arg0: i32, %arg1: i32, %arg2: memref<1x256x128xbf16, #tpu.memory_space<vmem>>, %arg3: memref<128x128xbf16, #tpu.memory_space<vmem>>, %arg4: memref<128x128xbf16, #tpu.memory_space<vmem>>, %arg5: memref<1x128xf32, #tpu.memory_space<vmem>>, %arg6: memref<1x256x128xf32, #tpu.memory_space<vmem>>, %arg7: memref<1x256x128xbf16, #tpu.memory_space<vmem>>) attributes {dimension_semantics = [#tpu.dimension_semantics<parallel>, #tpu.dimension_semantics<parallel>], iteration_bounds = array<i64: 2, 1>, scalar_prefetch = 0 : i64, scratch_operands = 0 : i64, tpu.core_type = #tpu.core_type<tc>, window_params = [{transform_indices = @transform_0, window_bounds = array<i64: 1, 256, 128>}, {pipeline_mode = #tpu.pipeline_mode<synchronous>, transform_indices = @transform_1, window_bounds = array<i64: 128, 128>}, {pipeline_mode = #tpu.pipeline_mode<synchronous>, transform_indices = @transform_2, window_bounds = array<i64: 128, 128>}, {pipeline_mode = #tpu.pipeline_mode<synchronous>, transform_indices = @transform_3, window_bounds = array<i64: 1, 128>}, {transform_indices = @transform_4, window_bounds = array<i64: 1, 256, 128>}, {transform_indices = @transform_5, window_bounds = array<i64: 1, 256, 128>}]} {
    %c0 = arith.constant 0 : index
    %c0_0 = arith.constant 0 : index
    %c0_1 = arith.constant 0 : index
    %0 = vector.load %arg2[%c0, %c0_0, %c0_1] : memref<1x256x128xbf16, #tpu.memory_space<vmem>>, vector<1x256x128xbf16>
    %1 = vector.shape_cast %0 : vector<1x256x128xbf16> to vector<256x128xbf16>
    %c0_2 = arith.constant 0 : index
    %c0_3 = arith.constant 0 : index
    %2 = vector.load %arg3[%c0_2, %c0_3] : memref<128x128xbf16, #tpu.memory_space<vmem>>, vector<128x128xbf16>
    %cst = arith.constant dense<0.000000e+00> : vector<256x128xf32>
    %3 = tpu.matmul %1, %2, %cst {dimension_numbers = #tpu.dot_dimension_numbers<[1], [0], [0], [1], [0, 0, 1, 1], [], []>} : vector<256x128xbf16>, vector<128x128xbf16>, vector<256x128xf32> -> vector<256x128xf32>
    %c0_4 = arith.constant 0 : index
    %c0_5 = arith.constant 0 : index
    %4 = vector.load %arg5[%c0_4, %c0_5] : memref<1x128xf32, #tpu.memory_space<vmem>>, vector<1x128xf32>
    %5 = vector.broadcast %4 : vector<1x128xf32> to vector<256x128xf32>
    %6 = arith.addf %3, %5 : vector<256x128xf32>
    %c0_6 = arith.constant 0 : index
    %c0_7 = arith.constant 0 : index
    %c0_8 = arith.constant 0 : index
    %7 = vector.load %arg6[%c0_6, %c0_7, %c0_8] : memref<1x256x128xf32, #tpu.memory_space<vmem>>, vector<1x256x128xf32>
    %8 = vector.shape_cast %7 : vector<1x256x128xf32> to vector<256x128xf32>
    %9 = vector.shape_cast %6 : vector<256x128xf32> to vector<1x256x128xf32>
    tpu.vector_store %arg6[%c0_6, %c0_7, %c0_8], %9 {strides = array<i32>} : memref<1x256x128xf32, #tpu.memory_space<vmem>>, vector<1x256x128xf32>,
    %c0_9 = arith.constant 0 : index
    %c0_10 = arith.constant 0 : index
    %10 = vector.load %arg4[%c0_9, %c0_10] : memref<128x128xbf16, #tpu.memory_space<vmem>>, vector<128x128xbf16>
    %cst_11 = arith.constant dense<0.000000e+00> : vector<256x128xf32>
    %11 = tpu.matmul %1, %10, %cst_11 {dimension_numbers = #tpu.dot_dimension_numbers<[1], [0], [0], [1], [0, 0, 1, 1], [], []>} : vector<256x128xbf16>, vector<128x128xbf16>, vector<256x128xf32> -> vector<256x128xf32>
    %12 = arith.truncf %11 : vector<256x128xf32> to vector<256x128xbf16>
    %c0_12 = arith.constant 0 : index
    %c0_13 = arith.constant 0 : index
    %c0_14 = arith.constant 0 : index
    %13 = vector.load %arg7[%c0_12, %c0_13, %c0_14] : memref<1x256x128xbf16, #tpu.memory_space<vmem>>, vector<1x256x128xbf16>
    %14 = vector.shape_cast %13 : vector<1x256x128xbf16> to vector<256x128xbf16>
    %15 = vector.shape_cast %12 : vector<256x128xbf16> to vector<1x256x128xbf16>
    tpu.vector_store %arg7[%c0_12, %c0_13, %c0_14], %15 {strides = array<i32>} : memref<1x256x128xbf16, #tpu.memory_space<vmem>>, vector<1x256x128xbf16>,
    return
  }
  func.func @transform_0(%arg0: i32, %arg1: i32) -> (i32, i32, i32) {
    %c0_i32 = arith.constant 0 : i32
    %c0_i32_0 = arith.constant 0 : i32
    return %arg0, %arg1, %c0_i32 : i32, i32, i32
  }
  func.func @transform_1(%arg0: i32, %arg1: i32) -> (i32, i32) {
    %c0_i32 = arith.constant 0 : i32
    %c0_i32_0 = arith.constant 0 : i32
    %c0_i32_1 = arith.constant 0 : i32
    return %c0_i32, %c0_i32_0 : i32, i32
  }
  func.func @transform_2(%arg0: i32, %arg1: i32) -> (i32, i32) {
    %c0_i32 = arith.constant 0 : i32
    %c0_i32_0 = arith.constant 0 : i32
    %c0_i32_1 = arith.constant 0 : i32
    return %c0_i32, %c0_i32_0 : i32, i32
  }
  func.func @transform_3(%arg0: i32, %arg1: i32) -> (i32, i32) {
    %c0_i32 = arith.constant 0 : i32
    %c0_i32_0 = arith.constant 0 : i32
    %c0_i32_1 = arith.constant 0 : i32
    return %c0_i32, %c0_i32_0 : i32, i32
  }
  func.func @transform_4(%arg0: i32, %arg1: i32) -> (i32, i32, i32) {
    %c0_i32 = arith.constant 0 : i32
    %c0_i32_0 = arith.constant 0 : i32
    return %arg0, %arg1, %c0_i32 : i32, i32, i32
  }
  func.func @transform_5(%arg0: i32, %arg1: i32) -> (i32, i32, i32) {
    %c0_i32 = arith.constant 0 : i32
    %c0_i32_0 = arith.constant 0 : i32
    return %arg0, %arg1, %c0_i32 : i32, i32, i32
  }
}

</mosaic_0001>

<llo_original>
// kernel: tpu_custom_call.1
$region0: #{tpu_custom_call.1}
  #allocation0 [shape = 'u32[]', space=smem, size = 0x4, offset = 0x4, fixed_abs, tag = 'smem constant byte address 0x4 - core index']
  #allocation1 [shape = 'u32[144,128]{1,0:T(1,128)}', space=vmem, size = 0x12000, scoped, tag = 'internal scratch']
  %s0 = inlined_call_operand.hbm [shape: bf16[2,256,128], index: 0, kind: input, shape index: {}]
  %s1 = inlined_call_operand.hbm [shape: bf16[128,128], index: 1, kind: input, shape index: {}]
  %s2 = inlined_call_operand.hbm [shape: bf16[128,128], index: 2, kind: input, shape index: {}]
  %s3 = inlined_call_operand.vmem [shape: f32[1,128], index: 3, kind: input, shape index: {}]
  %s4 = inlined_call_operand.hbm [shape: f32[2,256,128], index: 4, kind: output, shape index: {0}]
  %s5 = inlined_call_operand.hbm [shape: bf16[2,256,128], index: 5, kind: output, shape index: {1}]
  %6 = xla_tuple %s4, %s5
  %s7 = sld [smem:[#allocation0]]
  $region69: #{tpu_custom_call.1} parent=0
    _
  %s9 = ssub.s32 1, %s7
  %s10 = scalar_select 0, %s9, %s7
  $region1: #{tpu_custom_call.1} parent=0
    #allocation2 [shape = 'u8[131072]{0}', space=vmem, size = 0x20000, scoped, tag = 'input window, operand 0']
    #allocation3 [shape = 's32[2]{0}', space=sflag, size = 0x8, scoped, tag = 'scoped memory for tpu_custom_call.1']
    #allocation4 [shape = 's32[2]{0}', space=sflag, size = 0x8, scoped, tag = 'scoped memory for tpu_custom_call.1']
    #allocation5 [shape = 'u8[32768]{0}', space=vmem, size = 0x8000, scoped, tag = 'input window, operand 1, single buffered']
    #allocation6 [shape = 's32[1]{0}', space=sflag, size = 0x4, scoped, tag = 'scoped memory for tpu_custom_call.1']
    #allocation7 [shape = 'u8[32768]{0}', space=vmem, size = 0x8000, scoped, tag = 'input window, operand 2, single buffered']
    #allocation8 [shape = 'u8[262144]{0}', space=vmem, size = 0x40000, scoped, tag = 'output window, operand 0']
    #allocation9 [shape = 'u8[131072]{0}', space=vmem, size = 0x20000, scoped, tag = 'output window, operand 1']
    #allocation10 [shape = 's32[2]{0}', space=sflag, size = 0x8, scoped, tag = 'scoped memory for tpu_custom_call.1']
    %11 = vsyncpa [#allocation3], 0
    %s12 = scalar_lea.sflag [#allocation3], 1
    %13 = vsyncpa %s12, 0
    %14 = vsyncpa [#allocation6], 0
    %15 = vsyncpa [#allocation4], 0
    %s16 = scalar_lea.sflag [#allocation4], 1
    %17 = vsyncpa %s16, 0
    %18 = vsyncpa [#allocation10], 0
    %s19 = scalar_lea.sflag [#allocation10], 1
    %20 = vsyncpa %s19, 0
    loop: start=0, step=1, limit=4
    $region2: #{tpu_custom_call.1} parent=1 // loop_pre_header
      _
    $region3: #{tpu_custom_call.1} parent=1 // loop_header
      %s22 = sphi 0, %s26
      %p23 = scmp.ge.s32.totalorder %s22, 4
      %s29 = sphi 0, %s41
      %s30 = sphi 0, %s37
      %s31 = sphi 0, %s29
      %s32 = sphi 0, %s30
      %s33 = sphi 0, %s31
      %s34 = sphi 0, %s32
      %s46 = sphi 0, %s48
      %s49 = sphi 0, %s46
      %s50 = sphi 0, %s49
      %s66 = sphi 0, %s50
      %s70 = sphi 0, %s70
      %s72 = sphi 0, %s70
      %s73 = sphi 0, %s72
      %s87 = sphi 0, %s73
      %s91 = sphi 0, %s91
      %s93 = sphi 0, %s91
      %s94 = sphi 0, %s93
      %s108 = sphi 0, %s94
      %s112 = sphi 0, %s112
      %s114 = sphi 0, %s112
      %s115 = sphi 0, %s114
      %s129 = sphi 0, %s115
      %s137 = sphi 0, %s139
      %s140 = sphi 0, %s137
      %s141 = sphi 0, %s140
      %s157 = sphi 0, %s141
      %s165 = sphi 0, %s167
      %s168 = sphi 0, %s165
      %s169 = sphi 0, %s168
      %s185 = sphi 0, %s169
    $region4: #{tpu_custom_call.1} parent=1 // loop_header_branch
      %25 = sbr.rel (%p23) target = $region8
    $region5: #{tpu_custom_call.1} parent=1 // loop_body
      %s27 = ssub.s32 %s22, 1
      %s28 = ssub.s32 %s22, 2
      %s35 = sadd.s32 1, %s30
      %p36 = scmp.ge.s32.totalorder %s35, 1
      %s37 = scalar_select %p36, 0, %s35
      %s38 = sadd.s32 1, %s29
      %s39 = scalar_select %p36, %s38, %s29
      %p40 = scmp.ge.s32.totalorder %s39, 2
      %s41 = scalar_select %p40, 0, %s39
      %s42 = ssub.s32 %s29, %s41
      %s43 = ssub.s32 %s30, %s37
      %s44 = sor.u32 %s42, %s43
      %p45 = scmp.eq.s32.totalorder %s44, 0
      %s47 = sadd.s32 %s46, 1
      %s48 = scalar_select %p45, %s46, %s47
      %p51 = pneg %p45
      %p52 = scmp.eq.s32.totalorder %s22, 1
      %p53 = por %p51, %p52
      %p54 = scmp.ne.s32.totalorder %s46, %s49
      %p55 = scmp.eq.s32.totalorder %s22, 0
      %p56 = por %p54, %p55
      %p57 = scmp.ne.s32.totalorder %s46, %s49
      %p58 = scmp.eq.s32.totalorder %s27, 1
      %p59 = por %p57, %p58
      %p60 = scmp.ne.s32.totalorder %s49, %s50
      %p61 = scmp.eq.s32.totalorder %s27, 0
      %p62 = por %p60, %p61
      %p63 = scmp.ne.s32.totalorder %s49, %s50
      %p64 = scmp.eq.s32.totalorder %s28, 1
      %p65 = por %p63, %p64
      %p67 = scmp.ne.s32.totalorder %s50, %s66
      %p68 = scmp.eq.s32.totalorder %s28, 0
      %p69 = por %p67, %p68
      %s71 = sadd.s32 %s70, 1
      %p74 = scmp.eq.s32.totalorder %s22, 1
      %p75 = scmp.ne.s32.totalorder %s70, %s72
      %p76 = scmp.eq.s32.totalorder %s22, 0
      %p77 = por %p75, %p76
      %p78 = scmp.ne.s32.totalorder %s70, %s72
      %p79 = scmp.eq.s32.totalorder %s27, 1
      %p80 = por %p78, %p79
      %p81 = scmp.ne.s32.totalorder %s72, %s73
      %p82 = scmp.eq.s32.totalorder %s27, 0
      %p83 = por %p81, %p82
      %p84 = scmp.ne.s32.totalorder %s72, %s73
      %p85 = scmp.eq.s32.totalorder %s28, 1
      %p86 = por %p84, %p85
      %p88 = scmp.ne.s32.totalorder %s73, %s87
      %p89 = scmp.eq.s32.totalorder %s28, 0
      %p90 = por %p88, %p89
      %s92 = sadd.s32 %s91, 1
      %p95 = scmp.eq.s32.totalorder %s22, 1
      %p96 = scmp.ne.s32.totalorder %s91, %s93
      %p97 = scmp.eq.s32.totalorder %s22, 0
      %p98 = por %p96, %p97
      %p99 = scmp.ne.s32.totalorder %s91, %s93
      %p100 = scmp.eq.s32.totalorder %s27, 1
      %p101 = por %p99, %p100
      %p102 = scmp.ne.s32.totalorder %s93, %s94
      %p103 = scmp.eq.s32.totalorder %s27, 0
      %p104 = por %p102, %p103
      %p105 = scmp.ne.s32.totalorder %s93, %s94
      %p106 = scmp.eq.s32.totalorder %s28, 1
      %p107 = por %p105, %p106
      %p109 = scmp.ne.s32.totalorder %s94, %s108
      %p110 = scmp.eq.s32.totalorder %s28, 0
      %p111 = por %p109, %p110
      %s113 = sadd.s32 %s112, 1
      %p116 = scmp.eq.s32.totalorder %s22, 1
      %p117 = scmp.ne.s32.totalorder %s112, %s114
      %p118 = scmp.eq.s32.totalorder %s22, 0
      %p119 = por %p117, %p118
      %p120 = scmp.ne.s32.totalorder %s112, %s114
      %p121 = scmp.eq.s32.totalorder %s27, 1
      %p122 = por %p120, %p121
      %p123 = scmp.ne.s32.totalorder %s114, %s115
      %p124 = scmp.eq.s32.totalorder %s27, 0
      %p125 = por %p123, %p124
      %p126 = scmp.ne.s32.totalorder %s114, %s115
      %p127 = scmp.eq.s32.totalorder %s28, 1
      %p128 = por %p126, %p127
      %p130 = scmp.ne.s32.totalorder %s115, %s129
      %p131 = scmp.eq.s32.totalorder %s28, 0
      %p132 = por %p130, %p131
      %s133 = ssub.s32 %s29, %s41
      %s134 = ssub.s32 %s30, %s37
      %s135 = sor.u32 %s133, %s134
      %p136 = scmp.eq.s32.totalorder %s135, 0
      %s138 = sadd.s32 %s137, 1
      %s139 = scalar_select %p136, %s137, %s138
      %p142 = pneg %p136
      %p143 = scmp.eq.s32.totalorder %s22, 1
      %p144 = por %p142, %p143
      %p145 = scmp.ne.s32.totalorder %s137, %s140
      %p146 = scmp.eq.s32.totalorder %s22, 0
      %p147 = por %p145, %p146
      %p148 = scmp.ne.s32.totalorder %s137, %s140
      %p149 = scmp.eq.s32.totalorder %s27, 1
      %p150 = por %p148, %p149
      %p151 = scmp.ne.s32.totalorder %s140, %s141
      %p152 = scmp.eq.s32.totalorder %s27, 0
      %p153 = por %p151, %p152
      %p154 = scmp.ne.s32.totalorder %s140, %s141
      %p155 = scmp.eq.s32.totalorder %s28, 1
      %p156 = por %p154, %p155
      %p158 = scmp.ne.s32.totalorder %s141, %s157
      %p159 = scmp.eq.s32.totalorder %s28, 0
      %p160 = por %p158, %p159
      %s161 = ssub.s32 %s29, %s41
      %s162 = ssub.s32 %s30, %s37
      %s163 = sor.u32 %s161, %s162
      %p164 = scmp.eq.s32.totalorder %s163, 0
      %s166 = sadd.s32 %s165, 1
      %s167 = scalar_select %p164, %s165, %s166
      %p170 = pneg %p164
      %p171 = scmp.eq.s32.totalorder %s22, 1
      %p172 = por %p170, %p171
      %p173 = scmp.ne.s32.totalorder %s165, %s168
      %p174 = scmp.eq.s32.totalorder %s22, 0
      %p175 = por %p173, %p174
      %p176 = scmp.ne.s32.totalorder %s165, %s168
      %p177 = scmp.eq.s32.totalorder %s27, 1
      %p178 = por %p176, %p177
      %p179 = scmp.ne.s32.totalorder %s168, %s169
      %p180 = scmp.eq.s32.totalorder %s27, 0
      %p181 = por %p179, %p180
      %p182 = scmp.ne.s32.totalorder %s168, %s169
      %p183 = scmp.eq.s32.totalorder %s28, 1
      %p184 = por %p182, %p183
      %p186 = scmp.ne.s32.totalorder %s169, %s185
      %p187 = scmp.eq.s32.totalorder %s28, 0
      %p188 = por %p186, %p187
      %p189 = scmp.le.s32.totalorder 1, %s22
      %p190 = scmp.lt.s32.totalorder %s22, 3
      %p191 = pnand %p189, %p190
      %p192 = pneg %p191
      // Predicated region
      $region9: #{tpu_custom_call.1} parent=5 // pred_check
        _
      $region10: #{tpu_custom_call.1} parent=5 // pred_check_branch
        %194 = sbr.rel (%p191) target = $region12
      $region11: #{tpu_custom_call.1} parent=5 // pred_region
        %s195 = ssub.s32 %s22, 1
        // Predicated region
        $region13: #{tpu_custom_call.1} parent=11 // pred_check
          %p196 = pneg %p83
        $region14: #{tpu_custom_call.1} parent=11 // pred_check_branch
          %198 = sbr.rel (%p196) target = $region16
        $region15: #{tpu_custom_call.1} parent=11 // pred_region
          %s200 = ssub.s32 1024, 1024
          %201 = vsyncadd [#allocation6], %s200
          %s202 = sshll.u32 [#allocation5], 4
          %s203 = int_to_ptr.vmem [resolvable:$true] %s202
          %208 = dma.hbm_to_vmem [thread:$0]  %s1, 1024, %s203, [#allocation6], 64, 64, 4
        $region16: #{tpu_custom_call.1} parent=11 // pred_fallthru
          _
        // Predicated region
        $region17: #{tpu_custom_call.1} parent=11 // pred_check
          %p209 = pneg %p104
        $region18: #{tpu_custom_call.1} parent=11 // pred_check_branch
          %211 = sbr.rel (%p209) target = $region20
        $region19: #{tpu_custom_call.1} parent=11 // pred_region
          %s213 = ssub.s32 1024, 1024
          %214 = vsyncadd [#allocation6], %s213
          %s215 = sshll.u32 [#allocation7], 4
          %s216 = int_to_ptr.vmem [resolvable:$true] %s215
          %221 = dma.hbm_to_vmem [thread:$0]  %s2, 1024, %s216, [#allocation6], 64, 64, 4
        $region20: #{tpu_custom_call.1} parent=11 // pred_fallthru
          _
        // Predicated region
        $region21: #{tpu_custom_call.1} parent=11 // pred_check
          %p222 = pneg %p125
        $region22: #{tpu_custom_call.1} parent=11 // pred_check_branch
          %224 = sbr.rel (%p222) target = $region24
        $region23: #{tpu_custom_call.1} parent=11 // pred_region
          _
        $region24: #{tpu_custom_call.1} parent=11 // pred_fallthru
          _
      $region12: #{tpu_custom_call.1} parent=5 // pred_fallthru
        _
      %p225 = scmp.lt.s32.totalorder %s22, 2
      // Predicated region
      $region25: #{tpu_custom_call.1} parent=5 // pred_check
        %p226 = pneg %p225
      $region26: #{tpu_custom_call.1} parent=5 // pred_check_branch
        %228 = sbr.rel (%p226) target = $region28
      $region27: #{tpu_custom_call.1} parent=5 // pred_region
        // Predicated region
        $region29: #{tpu_custom_call.1} parent=27 // pred_check
          %p229 = pneg %p56
        $region30: #{tpu_custom_call.1} parent=27 // pred_check_branch
          %231 = sbr.rel (%p229) target = $region32
        $region31: #{tpu_custom_call.1} parent=27 // pred_region
          %s232 = sand.u32 %s46, 1
          %s233 = scalar_lea.sflag [#allocation3], %s232
          %s234 = sand.u32 %s46, 1
          %s235 = smul.addr %s234, 128
          %s236 = scalar_lea.vmem [#allocation2], %s235
          %s237 = smul.u32 32, %s30
          %s239 = ssub.s32 2048, 2048
          %240 = vsyncadd %s233, %s239
          %s241 = smul.addr %s29, 32
          %s242 = sadd.s32 %s237, %s241
          %s243 = smul.addr %s242, 64
          %s244 = scalar_lea.hbm %s0, %s243
          %s245 = sshll.u32 %s236, 4
          %s246 = int_to_ptr.vmem [resolvable:$true] %s245
          %251 = dma.hbm_to_vmem [thread:$0]  %s244, 2048, %s246, %s233, 64, 64, 4
        $region32: #{tpu_custom_call.1} parent=27 // pred_fallthru
          _
      $region28: #{tpu_custom_call.1} parent=5 // pred_fallthru
        _
      %p252 = scmp.le.s32.totalorder 1, %s22
      %p253 = scmp.lt.s32.totalorder %s22, 3
      %p254 = pnand %p252, %p253
      %p255 = pneg %p254
      // Predicated region
      $region33: #{tpu_custom_call.1} parent=5 // pred_check
        _
      $region34: #{tpu_custom_call.1} parent=5 // pred_check_branch
        %257 = sbr.rel (%p254) target = $region36
      $region35: #{tpu_custom_call.1} parent=5 // pred_region
        %s258 = ssub.s32 %s22, 1
        %s259 = sand.u32 %s49, 1
        %s260 = scalar_lea.sflag [#allocation3], %s259
        %s261 = sand.u32 %s49, 1
        %s262 = smul.addr %s261, 128
        %s263 = scalar_lea.vmem [#allocation2], %s262
        // Predicated region
        $region37: #{tpu_custom_call.1} parent=35 // pred_check
          %p264 = pneg %p62
        $region38: #{tpu_custom_call.1} parent=35 // pred_check_branch
          %266 = sbr.rel (%p264) target = $region40
        $region39: #{tpu_custom_call.1} parent=35 // pred_region
          %267 = dma.done %s260, 2048
        $region40: #{tpu_custom_call.1} parent=35 // pred_fallthru
          _
        // Predicated region
        $region41: #{tpu_custom_call.1} parent=35 // pred_check
          %p268 = pneg %p83
        $region42: #{tpu_custom_call.1} parent=35 // pred_check_branch
          %270 = sbr.rel (%p268) target = $region44
        $region43: #{tpu_custom_call.1} parent=35 // pred_region
          %271 = dma.done [#allocation6], 1024
        $region44: #{tpu_custom_call.1} parent=35 // pred_fallthru
          _
        // Predicated region
        $region45: #{tpu_custom_call.1} parent=35 // pred_check
          %p272 = pneg %p104
        $region46: #{tpu_custom_call.1} parent=35 // pred_check_branch
          %274 = sbr.rel (%p272) target = $region48
        $region47: #{tpu_custom_call.1} parent=35 // pred_region
          %275 = dma.done [#allocation6], 1024
        $region48: #{tpu_custom_call.1} parent=35 // pred_fallthru
          _
        %s276 = sand.u32 %s49, 1
        %s277 = scalar_lea.sflag [#allocation3], %s276
        %s278 = sand.u32 %s49, 1
        %s279 = smul.addr %s278, 128
        %s280 = scalar_lea.vmem [#allocation2], %s279
        %p281 = pneg %p62
        %p282 = pneg %p59
        %p283 = pneg %p83
        %p284 = pneg %p80
        %p285 = pneg %p104
        %p286 = pneg %p101
        %p287 = pneg %p125
        %p288 = pneg %p122
        %p289 = pneg %p153
        %p290 = pneg %p150
        %s291 = sand.u32 %s140, 1
        %s292 = scalar_lea.sflag [#allocation4], %s291
        %s293 = sand.u32 %s140, 1
        %s294 = smul.addr %s293, 256
        %s295 = scalar_lea.vmem [#allocation8], %s294
        %p296 = pneg %p181
        %p297 = pneg %p178
        %s298 = sand.u32 %s168, 1
        %s299 = scalar_lea.sflag [#allocation10], %s298
        %s300 = sand.u32 %s168, 1
        %s301 = smul.addr %s300, 128
        %s302 = scalar_lea.vmem [#allocation9], %s301
        %s303 = smul.u32 32, %s32
        %s304 = smul.u32 32, %s32
        %s305 = smul.u32 32, %s32
        %v307 = vld [vmem:[%s263] sm:$0xf]
        %v308 = vld [vmem:[%s263 + $0x4] sm:$0xf]
        %v309 = vld [vmem:[%s263 + $0x8] sm:$0xf]
        %v310 = vld [vmem:[%s263 + $0xc] sm:$0xf]
        %v311 = vld [vmem:[%s263 + $0x10] sm:$0xf]
        %v312 = vld [vmem:[%s263 + $0x14] sm:$0xf]
        %v313 = vld [vmem:[%s263 + $0x18] sm:$0xf]
        %v314 = vld [vmem:[%s263 + $0x1c] sm:$0xf]
        %v315 = vld [vmem:[%s263 + $0x20] sm:$0xf]
        %v316 = vld [vmem:[%s263 + $0x24] sm:$0xf]
        %v317 = vld [vmem:[%s263 + $0x28] sm:$0xf]
        %v318 = vld [vmem:[%s263 + $0x2c] sm:$0xf]
        %v319 = vld [vmem:[%s263 + $0x30] sm:$0xf]
        %v320 = vld [vmem:[%s263 + $0x34] sm:$0xf]
        %v321 = vld [vmem:[%s263 + $0x38] sm:$0xf]
        %v322 = vld [vmem:[%s263 + $0x3c] sm:$0xf]
        %v323 = vld [vmem:[%s263 + $0x40] sm:$0xf]
        %v324 = vld [vmem:[%s263 + $0x44] sm:$0xf]
        %v325 = vld [vmem:[%s263 + $0x48] sm:$0xf]
        %v326 = vld [vmem:[%s263 + $0x4c] sm:$0xf]
        %v327 = vld [vmem:[%s263 + $0x50] sm:$0xf]
        %v328 = vld [vmem:[%s263 + $0x54] sm:$0xf]
        %v329 = vld [vmem:[%s263 + $0x58] sm:$0xf]
        %v330 = vld [vmem:[%s263 + $0x5c] sm:$0xf]
        %v331 = vld [vmem:[%s263 + $0x60] sm:$0xf]
        %v332 = vld [vmem:[%s263 + $0x64] sm:$0xf]
        %v333 = vld [vmem:[%s263 + $0x68] sm:$0xf]
        %v334 = vld [vmem:[%s263 + $0x6c] sm:$0xf]
        %v335 = vld [vmem:[%s263 + $0x70] sm:$0xf]
        %v336 = vld [vmem:[%s263 + $0x74] sm:$0xf]
        %v337 = vld [vmem:[%s263 + $0x78] sm:$0xf]
        %v338 = vld [vmem:[%s263 + $0x7c] sm:$0xf]
        %v339 = vld [vmem:[#allocation5] sm:$0xf]
        %v340 = vld [vmem:[#allocation5 + $0x4] sm:$0xf]
        %v341 = vld [vmem:[#allocation5 + $0x8] sm:$0xf]
        %v342 = vld [vmem:[#allocation5 + $0xc] sm:$0xf]
        %v343 = vld [vmem:[#allocation5 + $0x10] sm:$0xf]
        %v344 = vld [vmem:[#allocation5 + $0x14] sm:$0xf]
        %v345 = vld [vmem:[#allocation5 + $0x18] sm:$0xf]
        %v346 = vld [vmem:[#allocation5 + $0x1c] sm:$0xf]
        %v347 = vld [vmem:[#allocation5 + $0x20] sm:$0xf]
        %v348 = vld [vmem:[#allocation5 + $0x24] sm:$0xf]
        %v349 = vld [vmem:[#allocation5 + $0x28] sm:$0xf]
        %v350 = vld [vmem:[#allocation5 + $0x2c] sm:$0xf]
        %v351 = vld [vmem:[#allocation5 + $0x30] sm:$0xf]
        %v352 = vld [vmem:[#allocation5 + $0x34] sm:$0xf]
        %v353 = vld [vmem:[#allocation5 + $0x38] sm:$0xf]
        %v354 = vld [vmem:[#allocation5 + $0x3c] sm:$0xf]
        %v355 = vld [vmem:[%s3] sm:$0x1]
        %v357 = vlaneseq
        %v358 = vshrl.u32 %v357, 7
        %v359 = vsub.s32 0, %v358
        %v360 = vrot.slane %v355, %v359
        %v394 = vunpack.c.l.b16 %v307
        %v395 = vunpack.c.l.b16 %v308
        %v396 = vunpack.c.l.b16 %v309
        %v397 = vunpack.c.l.b16 %v310
        %v398 = vunpack.c.l.b16 %v311
        %v399 = vunpack.c.l.b16 %v312
        %v400 = vunpack.c.l.b16 %v313
        %v401 = vunpack.c.l.b16 %v314
        %v402 = vunpack.c.l.b16 %v315
        %v403 = vunpack.c.l.b16 %v316
        %v404 = vunpack.c.l.b16 %v317
        %v405 = vunpack.c.l.b16 %v318
        %v406 = vunpack.c.l.b16 %v319
        %v407 = vunpack.c.l.b16 %v320
        %v408 = vunpack.c.l.b16 %v321
        %v409 = vunpack.c.l.b16 %v322
        %v410 = vunpack.c.l.b16 %v323
        %v411 = vunpack.c.l.b16 %v324
        %v412 = vunpack.c.l.b16 %v325
        %v413 = vunpack.c.l.b16 %v326
        %v414 = vunpack.c.l.b16 %v327
        %v415 = vunpack.c.l.b16 %v328
        %v416 = vunpack.c.l.b16 %v329
        %v417 = vunpack.c.l.b16 %v330
        %v418 = vunpack.c.l.b16 %v331
        %v419 = vunpack.c.l.b16 %v332
        %v420 = vunpack.c.l.b16 %v333
        %v421 = vunpack.c.l.b16 %v334
        %v422 = vunpack.c.l.b16 %v335
        %v423 = vunpack.c.l.b16 %v336
        %v424 = vunpack.c.l.b16 %v337
        %v425 = vunpack.c.l.b16 %v338
        %v426 = vpack.c.b16 %v395, %v394
        %v427 = vpack.c.b16 %v397, %v396
        %v428 = vpack.c.b16 %v399, %v398
        %v429 = vpack.c.b16 %v401, %v400
        %v430 = vpack.c.b16 %v403, %v402
        %v431 = vpack.c.b16 %v405, %v404
        %v432 = vpack.c.b16 %v407, %v406
        %v433 = vpack.c.b16 %v409, %v408
        %v434 = vpack.c.b16 %v411, %v410
        %v435 = vpack.c.b16 %v413, %v412
        %v436 = vpack.c.b16 %v415, %v414
        %v437 = vpack.c.b16 %v417, %v416
        %v438 = vpack.c.b16 %v419, %v418
        %v439 = vpack.c.b16 %v421, %v420
        %v440 = vpack.c.b16 %v423, %v422
        %v441 = vpack.c.b16 %v425, %v424
        %v474 = vunpack.c.l.b16 %v339
        %v475 = vunpack.c.l.b16 %v340
        %v476 = vunpack.c.l.b16 %v341
        %v477 = vunpack.c.l.b16 %v342
        %v478 = vunpack.c.l.b16 %v343
        %v479 = vunpack.c.l.b16 %v344
        %v480 = vunpack.c.l.b16 %v345
        %v481 = vunpack.c.l.b16 %v346
        %v482 = vunpack.c.l.b16 %v347
        %v483 = vunpack.c.l.b16 %v348
        %v484 = vunpack.c.l.b16 %v349
        %v485 = vunpack.c.l.b16 %v350
        %v486 = vunpack.c.l.b16 %v351
        %v487 = vunpack.c.l.b16 %v352
        %v488 = vunpack.c.l.b16 %v353
        %v489 = vunpack.c.l.b16 %v354
        %v490 = vpack.c.b16 %v475, %v474
        %v491 = vpack.c.b16 %v477, %v476
        %v492 = vpack.c.b16 %v479, %v478
        %v493 = vpack.c.b16 %v481, %v480
        %v494 = vpack.c.b16 %v483, %v482
        %v495 = vpack.c.b16 %v485, %v484
        %v496 = vpack.c.b16 %v487, %v486
        %v497 = vpack.c.b16 %v489, %v488
        %506 = vmatprep.subr.bf16.mxu0 0
        %507 = vmatpush1.bf16.msra.mxu0 %v497
        %508 = vmatprep.subr.bf16.mxu0 0
        %509 = vmatpush1.bf16.msra.mxu0 %v496
        %510 = vmatprep.subr.bf16.mxu0 0
        %511 = vmatpush1.bf16.msra.mxu0 %v495
        %512 = vmatprep.subr.bf16.mxu0 0
        %513 = vmatpush1.bf16.msra.mxu0 %v494
        %514 = vmatprep.subr.bf16.mxu0 0
        %515 = vmatpush1.bf16.msra.mxu0 %v493
        %516 = vmatprep.subr.bf16.mxu0 0
        %517 = vmatpush1.bf16.msra.mxu0 %v492
        %518 = vmatprep.subr.bf16.mxu0 0
        %519 = vmatpush1.bf16.msra.mxu0 %v491
        %520 = vmatprep.subr.bf16.mxu0 0
        %521 = vmatpush1.bf16.msra.mxu0 %v490
        %522 = vmatprep.subr.bf16.mxu0 0
        %523 = vmatpush2.bf16.msra.mxu0 0
        %524 = vmatprep.subr.bf16.mxu0 0
        %525 = vmatpush2.bf16.msra.mxu0 0
        %526 = vmatprep.subr.bf16.mxu0 0
        %527 = vmatpush2.bf16.msra.mxu0 0
        %528 = vmatprep.subr.bf16.mxu0 0
        %529 = vmatpush2.bf16.msra.mxu0 0
        %530 = vmatprep.subr.bf16.mxu0 0
        %531 = vmatpush2.bf16.msra.mxu0 0
        %532 = vmatprep.subr.bf16.mxu0 0
        %533 = vmatpush2.bf16.msra.mxu0 0
        %534 = vmatprep.subr.bf16.mxu0 0
        %535 = vmatpush2.bf16.msra.mxu0 0
        %536 = vmatprep.subr.bf16.mxu0 0
        %537 = vmatpush2.bf16.msra.mxu0 0
        %538 = vmatprep.mubr.bf16.mxu0 0
        %539 = vmatmul.mubr.bf16.gmra.mxu0 %v426
        %v540 = vpop.f32.mrf.mxu0
        %v541 = vadd.f32 %v360, %v540
        %v542 = vpop.f32.mrf.mxu0
        %v543 = vpop.f32.mrf.mxu0
        %v544 = vadd.f32 %v360, %v543
        %v545 = vpop.f32.mrf.mxu0
        %546 = vmatprep.mubr.bf16.mxu0 0
        %547 = vmatmul.mubr.bf16.gmra.mxu0 %v427
        %v548 = vpop.f32.mrf.mxu0
        %v549 = vadd.f32 %v360, %v548
        %v550 = vpop.f32.mrf.mxu0
        %v551 = vpop.f32.mrf.mxu0
        %v552 = vadd.f32 %v360, %v551
        %v553 = vpop.f32.mrf.mxu0
        %554 = vmatprep.mubr.bf16.mxu0 0
        %555 = vmatmul.mubr.bf16.gmra.mxu0 %v428
        %v556 = vpop.f32.mrf.mxu0
        %v557 = vadd.f32 %v360, %v556
        %v558 = vpop.f32.mrf.mxu0
        %v559 = vpop.f32.mrf.mxu0
        %v560 = vadd.f32 %v360, %v559
        %v561 = vpop.f32.mrf.mxu0
        %562 = vmatprep.mubr.bf16.mxu0 0
        %563 = vmatmul.mubr.bf16.gmra.mxu0 %v429
        %v564 = vpop.f32.mrf.mxu0
        %v565 = vadd.f32 %v360, %v564
        %v566 = vpop.f32.mrf.mxu0
        %v567 = vpop.f32.mrf.mxu0
        %v568 = vadd.f32 %v360, %v567
        %v569 = vpop.f32.mrf.mxu0
        %570 = vmatprep.mubr.bf16.mxu0 0
        %571 = vmatmul.mubr.bf16.gmra.mxu0 %v430
        %v572 = vpop.f32.mrf.mxu0
        %v573 = vadd.f32 %v360, %v572
        %v574 = vpop.f32.mrf.mxu0
        %v575 = vpop.f32.mrf.mxu0
        %v576 = vadd.f32 %v360, %v575
        %v577 = vpop.f32.mrf.mxu0
        %578 = vmatprep.mubr.bf16.mxu0 0
        %579 = vmatmul.mubr.bf16.gmra.mxu0 %v431
        %v580 = vpop.f32.mrf.mxu0
        %v581 = vadd.f32 %v360, %v580
        %v582 = vpop.f32.mrf.mxu0
        %v583 = vpop.f32.mrf.mxu0
        %v584 = vadd.f32 %v360, %v583
        %v585 = vpop.f32.mrf.mxu0
        %586 = vmatprep.mubr.bf16.mxu0 0
        %587 = vmatmul.mubr.bf16.gmra.mxu0 %v432
        %v588 = vpop.f32.mrf.mxu0
        %v589 = vadd.f32 %v360, %v588
        %v590 = vpop.f32.mrf.mxu0
        %v591 = vpop.f32.mrf.mxu0
        %v592 = vadd.f32 %v360, %v591
        %v593 = vpop.f32.mrf.mxu0
        %594 = vmatprep.mubr.bf16.mxu0 0
        %595 = vmatmul.mubr.bf16.gmra.mxu0 %v433
        %v596 = vpop.f32.mrf.mxu0
        %v597 = vadd.f32 %v360, %v596
        %v598 = vpop.f32.mrf.mxu0
        %v599 = vpop.f32.mrf.mxu0
        %v600 = vadd.f32 %v360, %v599
        %v601 = vpop.f32.mrf.mxu0
        %602 = vmatprep.mubr.bf16.mxu0 0
        %603 = vmatmul.mubr.bf16.gmra.mxu0 %v434
        %v604 = vpop.f32.mrf.mxu0
        %v605 = vadd.f32 %v360, %v604
        %v606 = vpop.f32.mrf.mxu0
        %v607 = vpop.f32.mrf.mxu0
        %v608 = vadd.f32 %v360, %v607
        %v609 = vpop.f32.mrf.mxu0
        %610 = vmatprep.mubr.bf16.mxu0 0
        %611 = vmatmul.mubr.bf16.gmra.mxu0 %v435
        %v612 = vpop.f32.mrf.mxu0
        %v613 = vadd.f32 %v360, %v612
        %v614 = vpop.f32.mrf.mxu0
        %v615 = vpop.f32.mrf.mxu0
        %v616 = vadd.f32 %v360, %v615
        %v617 = vpop.f32.mrf.mxu0
        %618 = vmatprep.mubr.bf16.mxu0 0
        %619 = vmatmul.mubr.bf16.gmra.mxu0 %v436
        %v620 = vpop.f32.mrf.mxu0
        %v621 = vadd.f32 %v360, %v620
        %v622 = vpop.f32.mrf.mxu0
        %v623 = vpop.f32.mrf.mxu0
        %v624 = vadd.f32 %v360, %v623
        %v625 = vpop.f32.mrf.mxu0
        %626 = vmatprep.mubr.bf16.mxu0 0
        %627 = vmatmul.mubr.bf16.gmra.mxu0 %v437
        %v628 = vpop.f32.mrf.mxu0
        %v629 = vadd.f32 %v360, %v628
        %v630 = vpop.f32.mrf.mxu0
        %v631 = vpop.f32.mrf.mxu0
        %v632 = vadd.f32 %v360, %v631
        %v633 = vpop.f32.mrf.mxu0
        %634 = vmatprep.mubr.bf16.mxu0 0
        %635 = vmatmul.mubr.bf16.gmra.mxu0 %v438
        %v636 = vpop.f32.mrf.mxu0
        %v637 = vadd.f32 %v360, %v636
        %v638 = vpop.f32.mrf.mxu0
        %v639 = vpop.f32.mrf.mxu0
        %v640 = vadd.f32 %v360, %v639
        %v641 = vpop.f32.mrf.mxu0
        %642 = vmatprep.mubr.bf16.mxu0 0
        %643 = vmatmul.mubr.bf16.gmra.mxu0 %v439
        %v644 = vpop.f32.mrf.mxu0
        %v645 = vadd.f32 %v360, %v644
        %v646 = vpop.f32.mrf.mxu0
        %v647 = vpop.f32.mrf.mxu0
        %v648 = vadd.f32 %v360, %v647
        %v649 = vpop.f32.mrf.mxu0
        %650 = vmatprep.mubr.bf16.mxu0 0
        %651 = vmatmul.mubr.bf16.gmra.mxu0 %v440
        %v652 = vpop.f32.mrf.mxu0
        %v653 = vadd.f32 %v360, %v652
        %v654 = vpop.f32.mrf.mxu0
        %v655 = vpop.f32.mrf.mxu0
        %v656 = vadd.f32 %v360, %v655
        %v657 = vpop.f32.mrf.mxu0
        %658 = vmatprep.mubr.bf16.mxu0 0
        %659 = vmatmul.mubr.bf16.gmra.mxu0 %v441
        %v660 = vpop.f32.mrf.mxu0
        %v661 = vadd.f32 %v360, %v660
        %v662 = vpop.f32.mrf.mxu0
        %v663 = vpop.f32.mrf.mxu0
        %v664 = vadd.f32 %v360, %v663
        %v665 = vpop.f32.mrf.mxu0
        %666 = vdwg.mxu0
        %667 = vst [vmem:[%s295] sm:$0xff] %v541
        %668 = vst [vmem:[%s295 + $0x8] sm:$0xff] %v544
        %669 = vst [vmem:[%s295 + $0x10] sm:$0xff] %v549
        %670 = vst [vmem:[%s295 + $0x18] sm:$0xff] %v552
        %671 = vst [vmem:[%s295 + $0x20] sm:$0xff] %v557
        %672 = vst [vmem:[%s295 + $0x28] sm:$0xff] %v560
        %673 = vst [vmem:[%s295 + $0x30] sm:$0xff] %v565
        %674 = vst [vmem:[%s295 + $0x38] sm:$0xff] %v568
        %675 = vst [vmem:[%s295 + $0x40] sm:$0xff] %v573
        %676 = vst [vmem:[%s295 + $0x48] sm:$0xff] %v576
        %677 = vst [vmem:[%s295 + $0x50] sm:$0xff] %v581
        %678 = vst [vmem:[%s295 + $0x58] sm:$0xff] %v584
        %679 = vst [vmem:[%s295 + $0x60] sm:$0xff] %v589
        %680 = vst [vmem:[%s295 + $0x68] sm:$0xff] %v592
        %681 = vst [vmem:[%s295 + $0x70] sm:$0xff] %v597
        %682 = vst [vmem:[%s295 + $0x78] sm:$0xff] %v600
        %683 = vst [vmem:[%s295 + $0x80] sm:$0xff] %v605
        %684 = vst [vmem:[%s295 + $0x88] sm:$0xff] %v608
        %685 = vst [vmem:[%s295 + $0x90] sm:$0xff] %v613
        %686 = vst [vmem:[%s295 + $0x98] sm:$0xff] %v616
        %687 = vst [vmem:[%s295 + $0xa0] sm:$0xff] %v621
        %688 = vst [vmem:[%s295 + $0xa8] sm:$0xff] %v624
        %689 = vst [vmem:[%s295 + $0xb0] sm:$0xff] %v629
        %690 = vst [vmem:[%s295 + $0xb8] sm:$0xff] %v632
        %691 = vst [vmem:[%s295 + $0xc0] sm:$0xff] %v637
        %692 = vst [vmem:[%s295 + $0xc8] sm:$0xff] %v640
        %693 = vst [vmem:[%s295 + $0xd0] sm:$0xff] %v645
        %694 = vst [vmem:[%s295 + $0xd8] sm:$0xff] %v648
        %695 = vst [vmem:[%s295 + $0xe0] sm:$0xff] %v653
        %696 = vst [vmem:[%s295 + $0xe8] sm:$0xff] %v656
        %697 = vst [vmem:[%s295 + $0xf0] sm:$0xff] %v661
        %698 = vst [vmem:[%s295 + $0xf8] sm:$0xff] %v664
        %v699 = vld [vmem:[#allocation7] sm:$0xf]
        %v700 = vld [vmem:[#allocation7 + $0x4] sm:$0xf]
        %v701 = vld [vmem:[#allocation7 + $0x8] sm:$0xf]
        %v702 = vld [vmem:[#allocation7 + $0xc] sm:$0xf]
        %v703 = vld [vmem:[#allocation7 + $0x10] sm:$0xf]
        %v704 = vld [vmem:[#allocation7 + $0x14] sm:$0xf]
        %v705 = vld [vmem:[#allocation7 + $0x18] sm:$0xf]
        %v706 = vld [vmem:[#allocation7 + $0x1c] sm:$0xf]
        %v707 = vld [vmem:[#allocation7 + $0x20] sm:$0xf]
        %v708 = vld [vmem:[#allocation7 + $0x24] sm:$0xf]
        %v709 = vld [vmem:[#allocation7 + $0x28] sm:$0xf]
        %v710 = vld [vmem:[#allocation7 + $0x2c] sm:$0xf]
        %v711 = vld [vmem:[#allocation7 + $0x30] sm:$0xf]
        %v712 = vld [vmem:[#allocation7 + $0x34] sm:$0xf]
        %v713 = vld [vmem:[#allocation7 + $0x38] sm:$0xf]
        %v714 = vld [vmem:[#allocation7 + $0x3c] sm:$0xf]
        %v731 = vunpack.c.l.b16 %v699
        %v732 = vunpack.c.l.b16 %v700
        %v733 = vunpack.c.l.b16 %v701
        %v734 = vunpack.c.l.b16 %v702
        %v735 = vunpack.c.l.b16 %v703
        %v736 = vunpack.c.l.b16 %v704
        %v737 = vunpack.c.l.b16 %v705
        %v738 = vunpack.c.l.b16 %v706
        %v739 = vunpack.c.l.b16 %v707
        %v740 = vunpack.c.l.b16 %v708
        %v741 = vunpack.c.l.b16 %v709
        %v742 = vunpack.c.l.b16 %v710
        %v743 = vunpack.c.l.b16 %v711
        %v744 = vunpack.c.l.b16 %v712
        %v745 = vunpack.c.l.b16 %v713
        %v746 = vunpack.c.l.b16 %v714
        %v747 = vpack.c.b16 %v732, %v731
        %v748 = vpack.c.b16 %v734, %v733
        %v749 = vpack.c.b16 %v736, %v735
        %v750 = vpack.c.b16 %v738, %v737
        %v751 = vpack.c.b16 %v740, %v739
        %v752 = vpack.c.b16 %v742, %v741
        %v753 = vpack.c.b16 %v744, %v743
        %v754 = vpack.c.b16 %v746, %v745
        %763 = vmatprep.subr.bf16.mxu0 0
        %764 = vmatpush1.bf16.msra.mxu0 %v754
        %765 = vmatprep.subr.bf16.mxu0 0
        %766 = vmatpush1.bf16.msra.mxu0 %v753
        %767 = vmatprep.subr.bf16.mxu0 0
        %768 = vmatpush1.bf16.msra.mxu0 %v752
        %769 = vmatprep.subr.bf16.mxu0 0
        %770 = vmatpush1.bf16.msra.mxu0 %v751
        %771 = vmatprep.subr.bf16.mxu0 0
        %772 = vmatpush1.bf16.msra.mxu0 %v750
        %773 = vmatprep.subr.bf16.mxu0 0
        %774 = vmatpush1.bf16.msra.mxu0 %v749
        %775 = vmatprep.subr.bf16.mxu0 0
        %776 = vmatpush1.bf16.msra.mxu0 %v748
        %777 = vmatprep.subr.bf16.mxu0 0
        %778 = vmatpush1.bf16.msra.mxu0 %v747
        %779 = vmatprep.subr.bf16.mxu0 0
        %780 = vmatpush2.bf16.msra.mxu0 0
        %781 = vmatprep.subr.bf16.mxu0 0
        %782 = vmatpush2.bf16.msra.mxu0 0
        %783 = vmatprep.subr.bf16.mxu0 0
        %784 = vmatpush2.bf16.msra.mxu0 0
        %785 = vmatprep.subr.bf16.mxu0 0
        %786 = vmatpush2.bf16.msra.mxu0 0
        %787 = vmatprep.subr.bf16.mxu0 0
        %788 = vmatpush2.bf16.msra.mxu0 0
        %789 = vmatprep.subr.bf16.mxu0 0
        %790 = vmatpush2.bf16.msra.mxu0 0
        %791 = vmatprep.subr.bf16.mxu0 0
        %792 = vmatpush2.bf16.msra.mxu0 0
        %793 = vmatprep.subr.bf16.mxu0 0
        %794 = vmatpush2.bf16.msra.mxu0 0
        %795 = vmatprep.mubr.bf16.mxu0 0
        %796 = vmatmul.mubr.bf16.gmra.mxu0 %v426
        %v797 = vpop.f32.mrf.mxu0
        %v798 = vadd.f32 0.0, %v797
        %v799 = vpop.f32.mrf.mxu0
        %v800 = vpop.f32.mrf.mxu0
        %v801 = vadd.f32 0.0, %v800
        %v802 = vpop.f32.mrf.mxu0
        %803 = vmatprep.mubr.bf16.mxu0 0
        %804 = vmatmul.mubr.bf16.gmra.mxu0 %v427
        %v805 = vpop.f32.mrf.mxu0
        %v806 = vadd.f32 0.0, %v805
        %v807 = vpop.f32.mrf.mxu0
        %v808 = vpop.f32.mrf.mxu0
        %v809 = vadd.f32 0.0, %v808
        %v810 = vpop.f32.mrf.mxu0
        %811 = vmatprep.mubr.bf16.mxu0 0
        %812 = vmatmul.mubr.bf16.gmra.mxu0 %v428
        %v813 = vpop.f32.mrf.mxu0
        %v814 = vadd.f32 0.0, %v813
        %v815 = vpop.f32.mrf.mxu0
        %v816 = vpop.f32.mrf.mxu0
        %v817 = vadd.f32 0.0, %v816
        %v818 = vpop.f32.mrf.mxu0
        %819 = vmatprep.mubr.bf16.mxu0 0
        %820 = vmatmul.mubr.bf16.gmra.mxu0 %v429
        %v821 = vpop.f32.mrf.mxu0
        %v822 = vadd.f32 0.0, %v821
        %v823 = vpop.f32.mrf.mxu0
        %v824 = vpop.f32.mrf.mxu0
        %v825 = vadd.f32 0.0, %v824
        %v826 = vpop.f32.mrf.mxu0
        %827 = vmatprep.mubr.bf16.mxu0 0
        %828 = vmatmul.mubr.bf16.gmra.mxu0 %v430
        %v829 = vpop.f32.mrf.mxu0
        %v830 = vadd.f32 0.0, %v829
        %v831 = vpop.f32.mrf.mxu0
        %v832 = vpop.f32.mrf.mxu0
        %v833 = vadd.f32 0.0, %v832
        %v834 = vpop.f32.mrf.mxu0
        %835 = vmatprep.mubr.bf16.mxu0 0
        %836 = vmatmul.mubr.bf16.gmra.mxu0 %v431
        %v837 = vpop.f32.mrf.mxu0
        %v838 = vadd.f32 0.0, %v837
        %v839 = vpop.f32.mrf.mxu0
        %v840 = vpop.f32.mrf.mxu0
        %v841 = vadd.f32 0.0, %v840
        %v842 = vpop.f32.mrf.mxu0
        %843 = vmatprep.mubr.bf16.mxu0 0
        %844 = vmatmul.mubr.bf16.gmra.mxu0 %v432
        %v845 = vpop.f32.mrf.mxu0
        %v846 = vadd.f32 0.0, %v845
        %v847 = vpop.f32.mrf.mxu0
        %v848 = vpop.f32.mrf.mxu0
        %v849 = vadd.f32 0.0, %v848
        %v850 = vpop.f32.mrf.mxu0
        %851 = vmatprep.mubr.bf16.mxu0 0
        %852 = vmatmul.mubr.bf16.gmra.mxu0 %v433
        %v853 = vpop.f32.mrf.mxu0
        %v854 = vadd.f32 0.0, %v853
        %v855 = vpop.f32.mrf.mxu0
        %v856 = vpop.f32.mrf.mxu0
        %v857 = vadd.f32 0.0, %v856
        %v858 = vpop.f32.mrf.mxu0
        %859 = vmatprep.mubr.bf16.mxu0 0
        %860 = vmatmul.mubr.bf16.gmra.mxu0 %v434
        %v861 = vpop.f32.mrf.mxu0
        %v862 = vadd.f32 0.0, %v861
        %v863 = vpop.f32.mrf.mxu0
        %v864 = vpop.f32.mrf.mxu0
        %v865 = vadd.f32 0.0, %v864
        %v866 = vpop.f32.mrf.mxu0
        %867 = vmatprep.mubr.bf16.mxu0 0
        %868 = vmatmul.mubr.bf16.gmra.mxu0 %v435
        %v869 = vpop.f32.mrf.mxu0
        %v870 = vadd.f32 0.0, %v869
        %v871 = vpop.f32.mrf.mxu0
        %v872 = vpop.f32.mrf.mxu0
        %v873 = vadd.f32 0.0, %v872
        %v874 = vpop.f32.mrf.mxu0
        %875 = vmatprep.mubr.bf16.mxu0 0
        %876 = vmatmul.mubr.bf16.gmra.mxu0 %v436
        %v877 = vpop.f32.mrf.mxu0
        %v878 = vadd.f32 0.0, %v877
        %v879 = vpop.f32.mrf.mxu0
        %v880 = vpop.f32.mrf.mxu0
        %v881 = vadd.f32 0.0, %v880
        %v882 = vpop.f32.mrf.mxu0
        %883 = vmatprep.mubr.bf16.mxu0 0
        %884 = vmatmul.mubr.bf16.gmra.mxu0 %v437
        %v885 = vpop.f32.mrf.mxu0
        %v886 = vadd.f32 0.0, %v885
        %v887 = vpop.f32.mrf.mxu0
        %v888 = vpop.f32.mrf.mxu0
        %v889 = vadd.f32 0.0, %v888
        %v890 = vpop.f32.mrf.mxu0
        %891 = vmatprep.mubr.bf16.mxu0 0
        %892 = vmatmul.mubr.bf16.gmra.mxu0 %v438
        %v893 = vpop.f32.mrf.mxu0
        %v894 = vadd.f32 0.0, %v893
        %v895 = vpop.f32.mrf.mxu0
        %v896 = vpop.f32.mrf.mxu0
        %v897 = vadd.f32 0.0, %v896
        %v898 = vpop.f32.mrf.mxu0
        %899 = vmatprep.mubr.bf16.mxu0 0
        %900 = vmatmul.mubr.bf16.gmra.mxu0 %v439
        %v901 = vpop.f32.mrf.mxu0
        %v902 = vadd.f32 0.0, %v901
        %v903 = vpop.f32.mrf.mxu0
        %v904 = vpop.f32.mrf.mxu0
        %v905 = vadd.f32 0.0, %v904
        %v906 = vpop.f32.mrf.mxu0
        %907 = vmatprep.mubr.bf16.mxu0 0
        %908 = vmatmul.mubr.bf16.gmra.mxu0 %v440
        %v909 = vpop.f32.mrf.mxu0
        %v910 = vadd.f32 0.0, %v909
        %v911 = vpop.f32.mrf.mxu0
        %v912 = vpop.f32.mrf.mxu0
        %v913 = vadd.f32 0.0, %v912
        %v914 = vpop.f32.mrf.mxu0
        %915 = vmatprep.mubr.bf16.mxu0 0
        %916 = vmatmul.mubr.bf16.gmra.mxu0 %v441
        %v917 = vpop.f32.mrf.mxu0
        %v918 = vadd.f32 0.0, %v917
        %v919 = vpop.f32.mrf.mxu0
        %v920 = vpop.f32.mrf.mxu0
        %v921 = vadd.f32 0.0, %v920
        %v922 = vpop.f32.mrf.mxu0
        %923 = vdwg.mxu0
        %v924 = vpack.c.bf16 %v801, %v798
        %v925 = vpack.c.bf16 %v809, %v806
        %v926 = vpack.c.bf16 %v817, %v814
        %v927 = vpack.c.bf16 %v825, %v822
        %v928 = vpack.c.bf16 %v833, %v830
        %v929 = vpack.c.bf16 %v841, %v838
        %v930 = vpack.c.bf16 %v849, %v846
        %v931 = vpack.c.bf16 %v857, %v854
        %v932 = vpack.c.bf16 %v865, %v862
        %v933 = vpack.c.bf16 %v873, %v870
        %v934 = vpack.c.bf16 %v881, %v878
        %v935 = vpack.c.bf16 %v889, %v886
        %v936 = vpack.c.bf16 %v897, %v894
        %v937 = vpack.c.bf16 %v905, %v902
        %v938 = vpack.c.bf16 %v913, %v910
        %v939 = vpack.c.bf16 %v921, %v918
        %v956 = vunpack.c.l.b16 %v924
        %v957 = vunpack.c.h.b16 %v924
        %v958 = vunpack.c.l.b16 %v925
        %v959 = vunpack.c.h.b16 %v925
        %v960 = vunpack.c.l.b16 %v926
        %v961 = vunpack.c.h.b16 %v926
        %v962 = vunpack.c.l.b16 %v927
        %v963 = vunpack.c.h.b16 %v927
        %v964 = vunpack.c.l.b16 %v928
        %v965 = vunpack.c.h.b16 %v928
        %v966 = vunpack.c.l.b16 %v929
        %v967 = vunpack.c.h.b16 %v929
        %v968 = vunpack.c.l.b16 %v930
        %v969 = vunpack.c.h.b16 %v930
        %v970 = vunpack.c.l.b16 %v931
        %v971 = vunpack.c.h.b16 %v931
        %v972 = vunpack.c.l.b16 %v932
        %v973 = vunpack.c.h.b16 %v932
        %v974 = vunpack.c.l.b16 %v933
        %v975 = vunpack.c.h.b16 %v933
        %v976 = vunpack.c.l.b16 %v934
        %v977 = vunpack.c.h.b16 %v934
        %v978 = vunpack.c.l.b16 %v935
        %v979 = vunpack.c.h.b16 %v935
        %v980 = vunpack.c.l.b16 %v936
        %v981 = vunpack.c.h.b16 %v936
        %v982 = vunpack.c.l.b16 %v937
        %v983 = vunpack.c.h.b16 %v937
        %v984 = vunpack.c.l.b16 %v938
        %v985 = vunpack.c.h.b16 %v938
        %v986 = vunpack.c.l.b16 %v939
        %v987 = vunpack.c.h.b16 %v939
        %v988 = vpack.c.b16 %v956, %v956
        %v989 = vpack.c.b16 %v957, %v957
        %v990 = vpack.c.b16 %v958, %v958
        %v991 = vpack.c.b16 %v959, %v959
        %v992 = vpack.c.b16 %v960, %v960
        %v993 = vpack.c.b16 %v961, %v961
        %v994 = vpack.c.b16 %v962, %v962
        %v995 = vpack.c.b16 %v963, %v963
        %v996 = vpack.c.b16 %v964, %v964
        %v997 = vpack.c.b16 %v965, %v965
        %v998 = vpack.c.b16 %v966, %v966
        %v999 = vpack.c.b16 %v967, %v967
        %v1000 = vpack.c.b16 %v968, %v968
        %v1001 = vpack.c.b16 %v969, %v969
        %v1002 = vpack.c.b16 %v970, %v970
        %v1003 = vpack.c.b16 %v971, %v971
        %v1004 = vpack.c.b16 %v972, %v972
        %v1005 = vpack.c.b16 %v973, %v973
        %v1006 = vpack.c.b16 %v974, %v974
        %v1007 = vpack.c.b16 %v975, %v975
        %v1008 = vpack.c.b16 %v976, %v976
        %v1009 = vpack.c.b16 %v977, %v977
        %v1010 = vpack.c.b16 %v978, %v978
        %v1011 = vpack.c.b16 %v979, %v979
        %v1012 = vpack.c.b16 %v980, %v980
        %v1013 = vpack.c.b16 %v981, %v981
        %v1014 = vpack.c.b16 %v982, %v982
        %v1015 = vpack.c.b16 %v983, %v983
        %v1016 = vpack.c.b16 %v984, %v984
        %v1017 = vpack.c.b16 %v985, %v985
        %v1018 = vpack.c.b16 %v986, %v986
        %v1019 = vpack.c.b16 %v987, %v987
        %1052 = vst [vmem:[%s302] sm:$0xf] %v988
        %1053 = vst [vmem:[%s302 + $0x4] sm:$0xf] %v989
        %1054 = vst [vmem:[%s302 + $0x8] sm:$0xf] %v990
        %1055 = vst [vmem:[%s302 + $0xc] sm:$0xf] %v991
        %1056 = vst [vmem:[%s302 + $0x10] sm:$0xf] %v992
        %1057 = vst [vmem:[%s302 + $0x14] sm:$0xf] %v993
        %1058 = vst [vmem:[%s302 + $0x18] sm:$0xf] %v994
        %1059 = vst [vmem:[%s302 + $0x1c] sm:$0xf] %v995
        %1060 = vst [vmem:[%s302 + $0x20] sm:$0xf] %v996
        %1061 = vst [vmem:[%s302 + $0x24] sm:$0xf] %v997
        %1062 = vst [vmem:[%s302 + $0x28] sm:$0xf] %v998
        %1063 = vst [vmem:[%s302 + $0x2c] sm:$0xf] %v999
        %1064 = vst [vmem:[%s302 + $0x30] sm:$0xf] %v1000
        %1065 = vst [vmem:[%s302 + $0x34] sm:$0xf] %v1001
        %1066 = vst [vmem:[%s302 + $0x38] sm:$0xf] %v1002
        %1067 = vst [vmem:[%s302 + $0x3c] sm:$0xf] %v1003
        %1068 = vst [vmem:[%s302 + $0x40] sm:$0xf] %v1004
        %1069 = vst [vmem:[%s302 + $0x44] sm:$0xf] %v1005
        %1070 = vst [vmem:[%s302 + $0x48] sm:$0xf] %v1006
        %1071 = vst [vmem:[%s302 + $0x4c] sm:$0xf] %v1007
        %1072 = vst [vmem:[%s302 + $0x50] sm:$0xf] %v1008
        %1073 = vst [vmem:[%s302 + $0x54] sm:$0xf] %v1009
        %1074 = vst [vmem:[%s302 + $0x58] sm:$0xf] %v1010
        %1075 = vst [vmem:[%s302 + $0x5c] sm:$0xf] %v1011
        %1076 = vst [vmem:[%s302 + $0x60] sm:$0xf] %v1012
        %1077 = vst [vmem:[%s302 + $0x64] sm:$0xf] %v1013
        %1078 = vst [vmem:[%s302 + $0x68] sm:$0xf] %v1014
        %1079 = vst [vmem:[%s302 + $0x6c] sm:$0xf] %v1015
        %1080 = vst [vmem:[%s302 + $0x70] sm:$0xf] %v1016
        %1081 = vst [vmem:[%s302 + $0x74] sm:$0xf] %v1017
        %1082 = vst [vmem:[%s302 + $0x78] sm:$0xf] %v1018
        %1083 = vst [vmem:[%s302 + $0x7c] sm:$0xf] %v1019
        %s1084 = sand.u32 %s140, 1
        %s1085 = scalar_lea.sflag [#allocation4], %s1084
        %s1086 = sand.u32 %s140, 1
        %s1087 = smul.addr %s1086, 256
        %s1088 = scalar_lea.vmem [#allocation8], %s1087
        %s1089 = sand.u32 %s168, 1
        %s1090 = scalar_lea.sflag [#allocation10], %s1089
        %s1091 = sand.u32 %s168, 1
        %s1092 = smul.addr %s1091, 128
        %s1093 = scalar_lea.vmem [#allocation9], %s1092
        // Predicated region
        $region49: #{tpu_custom_call.1} parent=35 // pred_check
          %p1094 = pneg %p150
        $region50: #{tpu_custom_call.1} parent=35 // pred_check_branch
          %1096 = sbr.rel (%p1094) target = $region52
        $region51: #{tpu_custom_call.1} parent=35 // pred_region
          %s1097 = smul.u32 32, %s32
          %s1099 = ssub.s32 4096, 4096
          %1100 = vsyncadd %s1085, %s1099
          %s1101 = smul.addr %s31, 32
          %s1102 = sadd.s32 %s1097, %s1101
          %s1103 = smul.addr %s1102, 128
          %s1104 = scalar_lea.hbm %s4, %s1103
          %s1105 = sshll.u32 %s1088, 4
          %s1106 = int_to_ptr.vmem [resolvable:$true] %s1105
          %1111 = dma.vmem_to_hbm [thread:$0]  %s1106, 4096, %s1104, %s1085, 128, 128, 8
        $region52: #{tpu_custom_call.1} parent=35 // pred_fallthru
          _
        // Predicated region
        $region53: #{tpu_custom_call.1} parent=35 // pred_check
          %p1112 = pneg %p178
        $region54: #{tpu_custom_call.1} parent=35 // pred_check_branch
          %1114 = sbr.rel (%p1112) target = $region56
        $region55: #{tpu_custom_call.1} parent=35 // pred_region
          %s1115 = smul.u32 32, %s32
          %s1117 = ssub.s32 2048, 2048
          %1118 = vsyncadd %s1090, %s1117
          %s1119 = smul.addr %s31, 32
          %s1120 = sadd.s32 %s1115, %s1119
          %s1121 = smul.addr %s1120, 64
          %s1122 = scalar_lea.hbm %s5, %s1121
          %s1123 = sshll.u32 %s1093, 4
          %s1124 = int_to_ptr.vmem [resolvable:$true] %s1123
          %1129 = dma.vmem_to_hbm [thread:$0]  %s1124, 2048, %s1122, %s1090, 64, 64, 4
        $region56: #{tpu_custom_call.1} parent=35 // pred_fallthru
          _
      $region36: #{tpu_custom_call.1} parent=5 // pred_fallthru
        _
      %p1130 = scmp.le.s32.totalorder 2, %s22
      // Predicated region
      $region57: #{tpu_custom_call.1} parent=5 // pred_check
        %p1131 = pneg %p1130
      $region58: #{tpu_custom_call.1} parent=5 // pred_check_branch
        %1133 = sbr.rel (%p1131) target = $region60
      $region59: #{tpu_custom_call.1} parent=5 // pred_region
        %s1134 = ssub.s32 %s22, 2
        // Predicated region
        $region61: #{tpu_custom_call.1} parent=59 // pred_check
          %p1135 = pneg %p156
        $region62: #{tpu_custom_call.1} parent=59 // pred_check_branch
          %1137 = sbr.rel (%p1135) target = $region64
        $region63: #{tpu_custom_call.1} parent=59 // pred_region
          %s1138 = sand.u32 %s141, 1
          %s1139 = scalar_lea.sflag [#allocation4], %s1138
          %s1140 = sand.u32 %s141, 1
          %s1141 = smul.addr %s1140, 256
          %s1142 = scalar_lea.vmem [#allocation8], %s1141
          %1143 = dma.done %s1139, 4096
        $region64: #{tpu_custom_call.1} parent=59 // pred_fallthru
          _
        // Predicated region
        $region65: #{tpu_custom_call.1} parent=59 // pred_check
          %p1144 = pneg %p184
        $region66: #{tpu_custom_call.1} parent=59 // pred_check_branch
          %1146 = sbr.rel (%p1144) target = $region68
        $region67: #{tpu_custom_call.1} parent=59 // pred_region
          %s1147 = sand.u32 %s169, 1
          %s1148 = scalar_lea.sflag [#allocation10], %s1147
          %s1149 = sand.u32 %s169, 1
          %s1150 = smul.addr %s1149, 128
          %s1151 = scalar_lea.vmem [#allocation9], %s1150
          %1152 = dma.done %s1148, 2048
        $region68: #{tpu_custom_call.1} parent=59 // pred_fallthru
          _
      $region60: #{tpu_custom_call.1} parent=5 // pred_fallthru
        _
    $region6: #{tpu_custom_call.1} parent=1 // loop_footer
      %s26 = sadd.s32 1, %s22
    $region7: #{tpu_custom_call.1} parent=1 // loop_footer_branch
      %21 = sbr.rel target = $region3
    $region8: #{tpu_custom_call.1} parent=1 // loop_exit
      _
    %1153 = vsyncpa [#allocation3], 1
    %s1154 = scalar_lea.sflag [#allocation3], 1
    %1155 = vsyncpa %s1154, 1
    %1156 = vsyncpa [#allocation6], 1
    %1157 = vsyncpa [#allocation4], 1
    %s1158 = scalar_lea.sflag [#allocation4], 1
    %1159 = vsyncpa %s1158, 1
    %1160 = vsyncpa [#allocation10], 1
    %s1161 = scalar_lea.sflag [#allocation10], 1
    %1162 = vsyncpa %s1161, 1

</llo_original>
